<compile_context>
chip_gen: v6e
topology: v6e:2x2x1
jax: 0.10.0
libtpu: 0.0.40
codegen_flags: <defaults>
</compile_context>

<pallas_src>
import math

import jax
import jax.numpy as jnp
from jax.experimental import pallas as pl
from jax.experimental.pallas import tpu as pltpu

_LANE = 128


def _round_up(n, m):
    return ((n + m - 1) // m) * m


# ----------------------------------------------------------------------------
# Kernel
# ----------------------------------------------------------------------------
def _make_kernel(hp, activation):
    if activation == "tanh":
        act = jnp.tanh
    elif activation == "relu":
        act = lambda z: jnp.maximum(z, 0.0)
    else:
        raise ValueError(f"unsupported activation: {activation}")

    def kernel(x_ref, w1_ref, b1_ref, w2_ref, b2_ref, clw_ref, clb_ref,
               value_ref, actor_ref):
        x = x_ref[...]
        # Fused first layer: [actor | critic] columns in one MXU op.
        h1 = act(jnp.dot(x, w1_ref[...], preferred_element_type=jnp.float32)
                 + b1_ref[...])
        # Fused second layer: block-diagonal weight keeps towers independent.
        h2 = act(jnp.dot(h1, w2_ref[...], preferred_element_type=jnp.float32)
                 + b2_ref[...])
        ha = h2[:, :hp]          # actor tower output   (TILE_B, Hp)
        hc = h2[:, hp:]          # critic tower output  (TILE_B, Hp)
        # critic_linear (Hp -> 1) as VPU multiply + lane reduction (skips MXU).
        v = jnp.sum(hc * clw_ref[...], axis=-1, keepdims=True) + clb_ref[...]
        # Lane-dense value store: broadcast across 128 lanes, slice in wrapper.
        value_ref[...] = jnp.broadcast_to(v, value_ref.shape)
        actor_ref[...] = ha

    return kernel


# ----------------------------------------------------------------------------
# Wrapper
# ----------------------------------------------------------------------------
def mlpbase_forward(x, fused, *, activation="tanh", tile_b=512):
    """x: (B, num_inputs) f32; fused: packed params from fuse_params().

    Returns (value (B, 1), hidden_actor (B, H))."""
    B, F = x.shape
    h, hp = fused["h"], fused["hp"]
    w1, b1, w2, b2, clw, clb = (fused["w1"], fused["b1"], fused["w2"],
                                fused["b2"], fused["clw"], fused["clb"])

    # Batch tile: multiple of 8 sublanes; pad B up to a tile multiple.
    tb = tile_b if B >= tile_b else _round_up(max(B, 1), 8)
    bp = _round_up(B, tb)
    if bp != B:
        x = jnp.pad(x, ((0, bp - B), (0, 0)))

    kernel = _make_kernel(hp, activation)

    value_p, actor_p = pl.pallas_call(
        kernel,
        out_shape=(
            jax.ShapeDtypeStruct((bp, _LANE), jnp.float32),   # value (lane-dense)
            jax.ShapeDtypeStruct((bp, hp), jnp.float32),      # hidden_actor
        ),
        grid=(bp // tb,),
        in_specs=[
            pl.BlockSpec((tb, F), lambda i: (i, 0)),          # x tile (double-buffered)
            pl.BlockSpec(w1.shape, lambda i: (0, 0)),         # weights stay VMEM-resident
            pl.BlockSpec(b1.shape, lambda i: (0, 0)),
            pl.BlockSpec(w2.shape, lambda i: (0, 0)),
            pl.BlockSpec(b2.shape, lambda i: (0, 0)),
            pl.BlockSpec(clw.shape, lambda i: (0, 0)),
            pl.BlockSpec(clb.shape, lambda i: (0, 0)),
        ],
        out_specs=(
            pl.BlockSpec((tb, _LANE), lambda i: (i, 0)),
            pl.BlockSpec((tb, hp), lambda i: (i, 0)),
        ),
        compiler_params=pltpu.CompilerParams(
            dimension_semantics=("parallel",)),               # v7x: shard batch across TCs
    )(x, w1, b1, w2, b2, clw, clb)

    return value_p[:B, :1], actor_p[:B, :h]


# ----------------------------------------------------------------------------
# Parameters
# ----------------------------------------------------------------------------
def _orthogonal(key, rows, cols, gain):
    """Deterministic orthogonal init (matches torch.nn.init.orthogonal_ semantics)."""
    n = max(rows, cols)
    a = jax.random.normal(key, (n, n), dtype=jnp.float32)
    q, r = jnp.linalg.qr(a)
    q = q * jnp.sign(jnp.diag(r))
    return gain * q[:rows, :cols]


def init_params(key, num_inputs, hidden_size):
    """Raw (un-fused) params: orthogonal(gain=sqrt(2)) weights, zero biases.
    Weights stored pre-transposed as (in_features, out_features)."""
    gain = math.sqrt(2.0)
    ks = jax.random.split(key, 5)
    return {
        "aw1": _orthogonal(ks[0], num_inputs, hidden_size, gain),
        "ab1": jnp.zeros((1, hidden_size), jnp.float32),
        "aw2": _orthogonal(ks[1], hidden_size, hidden_size, gain),
        "ab2": jnp.zeros((1, hidden_size), jnp.float32),
        "cw1": _orthogonal(ks[2], num_inputs, hidden_size, gain),
        "cb1": jnp.zeros((1, hidden_size), jnp.float32),
        "cw2": _orthogonal(ks[3], hidden_size, hidden_size, gain),
        "cb2": jnp.zeros((1, hidden_size), jnp.float32),
        "clw": _orthogonal(ks[4], hidden_size, 1, gain),
        "clb": jnp.zeros((1, 1), jnp.float32),
    }


def fuse_params(raw, hidden_size):
    """Pack raw params into lane-padded, fused operands for the kernel.
    Column order: [actor | critic] — biases packed in the same order."""
    h = hidden_size
    hp = _round_up(h, _LANE)

    def pad_cols(w):   # (r, h) -> (r, hp), zero-padded columns
        return jnp.pad(w, ((0, 0), (0, hp - h)))

    def pad_both(w):   # (h, h) -> (hp, hp)
        return jnp.pad(w, ((0, hp - h), (0, hp - h)))

    w1 = jnp.concatenate([pad_cols(raw["aw1"]), pad_cols(raw["cw1"])], axis=1)
    b1 = jnp.concatenate([pad_cols(raw["ab1"]), pad_cols(raw["cb1"])], axis=1)
    zeros = jnp.zeros((hp, hp), jnp.float32)
    w2 = jnp.concatenate(
        [jnp.concatenate([pad_both(raw["aw2"]), zeros], axis=1),
         jnp.concatenate([zeros, pad_both(raw["cw2"])], axis=1)], axis=0)
    b2 = jnp.concatenate([pad_cols(raw["ab2"]), pad_cols(raw["cb2"])], axis=1)
    clw = pad_cols(raw["clw"].T)          # (1, hp) row for VPU mul + lane reduce
    return {"w1": w1, "b1": b1, "w2": w2, "b2": b2,
            "clw": clw, "clb": raw["clb"], "h": h, "hp": hp}


class MLPBasePallas:
    """Non-recurrent MLPBase. forward(inputs, rnn_hxs, masks) -> (value, hidden_actor, rnn_hxs)."""

    def __init__(self, num_inputs, hidden_size=100, hidden_activation="tanh", key=None):
        if key is None:
            key = jax.random.PRNGKey(0)
        self.hidden_size = hidden_size
        self.activation = hidden_activation
        self.raw = init_params(key, num_inputs, hidden_size)
        self.fused = fuse_params(self.raw, hidden_size)

    def forward(self, inputs, rnn_hxs, masks):
        # masks / rnn_hxs untouched on the non-recurrent path.
        value, hidden_actor = mlpbase_forward(
            inputs, self.fused, activation=self.activation)
        return value, hidden_actor, rnn_hxs


# ----------------------------------------------------------------------------
# Reference + smoke test
# ----------------------------------------------------------------------------
def _reference_forward(x, p):
    ha = jnp.tanh(x @ p["aw1"] + p["ab1"])
    ha = jnp.tanh(ha @ p["aw2"] + p["ab2"])
    hc = jnp.tanh(x @ p["cw1"] + p["cb1"])
    hc = jnp.tanh(hc @ p["cw2"] + p["cb2"])
    return hc @ p["clw"] + p["clb"], ha


if __name__ == "__main__":
    key = jax.random.PRNGKey(0)
    k_x, k_p = jax.random.split(key)

    batch, num_inputs, hidden_size = 8, 16, 32
    x = jax.random.normal(k_x, (batch, num_inputs), dtype=jnp.float32)
    rnn_hxs = jnp.zeros((batch, 1), dtype=jnp.float32)   # recurrent_hidden_state_size == 1
    masks = jnp.ones((batch, 1), dtype=jnp.float32)

    model = MLPBasePallas(num_inputs, hidden_size=hidden_size,
                          hidden_activation="tanh", key=k_p)
    value, hidden_actor, rnn_hxs_out = model.forward(x, rnn_hxs, masks)
    jax.block_until_ready((value, hidden_actor, rnn_hxs_out))

    # Correctness check against pure-JAX reference (un-fused params).
    ref_v, ref_a = _reference_forward(x, model.raw)
    assert value.shape == (batch, 1) and hidden_actor.shape == (batch, hidden_size)
    assert jnp.allclose(value, ref_v, atol=1e-5), "value mismatch"
    assert jnp.allclose(hidden_actor, ref_a, atol=1e-5), "hidden_actor mismatch"

    print("KERNEL_OK")
</pallas_src>

<mosaic_0001>
module attributes {stable_mosaic.version = 11 : i64} {
  func.func @kernel(%arg0: i32, %arg1: memref<8x16xf32, #tpu.memory_space<vmem>>, %arg2: memref<16x256xf32, #tpu.memory_space<vmem>>, %arg3: memref<1x256xf32, #tpu.memory_space<vmem>>, %arg4: memref<256x256xf32, #tpu.memory_space<vmem>>, %arg5: memref<1x256xf32, #tpu.memory_space<vmem>>, %arg6: memref<1x128xf32, #tpu.memory_space<vmem>>, %arg7: memref<1x1xf32, #tpu.memory_space<vmem>>, %arg8: memref<8x128xf32, #tpu.memory_space<vmem>>, %arg9: memref<8x128xf32, #tpu.memory_space<vmem>>) attributes {dimension_semantics = [#tpu.dimension_semantics<parallel>], iteration_bounds = array<i64: 1>, scalar_prefetch = 0 : i64, scratch_operands = 0 : i64, tpu.core_type = #tpu.core_type<tc>, window_params = [{transform_indices = @transform_0, window_bounds = array<i64: 8, 16>}, {pipeline_mode = #tpu.pipeline_mode<synchronous>, transform_indices = @transform_1, window_bounds = array<i64: 16, 256>}, {pipeline_mode = #tpu.pipeline_mode<synchronous>, transform_indices = @transform_2, window_bounds = array<i64: 1, 256>}, {pipeline_mode = #tpu.pipeline_mode<synchronous>, transform_indices = @transform_3, window_bounds = array<i64: 256, 256>}, {pipeline_mode = #tpu.pipeline_mode<synchronous>, transform_indices = @transform_4, window_bounds = array<i64: 1, 256>}, {pipeline_mode = #tpu.pipeline_mode<synchronous>, transform_indices = @transform_5, window_bounds = array<i64: 1, 128>}, {pipeline_mode = #tpu.pipeline_mode<synchronous>, transform_indices = @transform_6, window_bounds = array<i64: 1, 1>}, {transform_indices = @transform_7, window_bounds = array<i64: 8, 128>}, {transform_indices = @transform_8, window_bounds = array<i64: 8, 128>}]} {
    %c0 = arith.constant 0 : index
    %c0_0 = arith.constant 0 : index
    %0 = vector.load %arg1[%c0, %c0_0] : memref<8x16xf32, #tpu.memory_space<vmem>>, vector<8x16xf32>
    %c0_1 = arith.constant 0 : index
    %c0_2 = arith.constant 0 : index
    %1 = vector.load %arg2[%c0_1, %c0_2] : memref<16x256xf32, #tpu.memory_space<vmem>>, vector<16x256xf32>
    %cst = arith.constant dense<0.000000e+00> : vector<8x256xf32>
    %2 = tpu.matmul %0, %1, %cst {dimension_numbers = #tpu.dot_dimension_numbers<[1], [0], [0], [1], [0, 0, 1, 1], [], []>} : vector<8x16xf32>, vector<16x256xf32>, vector<8x256xf32> -> vector<8x256xf32>
    %c0_3 = arith.constant 0 : index
    %c0_4 = arith.constant 0 : index
    %3 = vector.load %arg3[%c0_3, %c0_4] : memref<1x256xf32, #tpu.memory_space<vmem>>, vector<1x256xf32>
    %4 = vector.broadcast %3 : vector<1x256xf32> to vector<8x256xf32>
    %5 = arith.addf %2, %4 : vector<8x256xf32>
    %6 = math.tanh %5 : vector<8x256xf32>
    %c0_5 = arith.constant 0 : index
    %c0_6 = arith.constant 0 : index
    %7 = vector.load %arg4[%c0_5, %c0_6] : memref<256x256xf32, #tpu.memory_space<vmem>>, vector<256x256xf32>
    %cst_7 = arith.constant dense<0.000000e+00> : vector<8x256xf32>
    %8 = tpu.matmul %6, %7, %cst_7 {dimension_numbers = #tpu.dot_dimension_numbers<[1], [0], [0], [1], [0, 0, 1, 1], [], []>} : vector<8x256xf32>, vector<256x256xf32>, vector<8x256xf32> -> vector<8x256xf32>
    %c0_8 = arith.constant 0 : index
    %c0_9 = arith.constant 0 : index
    %9 = vector.load %arg5[%c0_8, %c0_9] : memref<1x256xf32, #tpu.memory_space<vmem>>, vector<1x256xf32>
    %10 = vector.broadcast %9 : vector<1x256xf32> to vector<8x256xf32>
    %11 = arith.addf %8, %10 : vector<8x256xf32>
    %12 = math.tanh %11 : vector<8x256xf32>
    %13 = vector.extract_strided_slice %12 {offsets = [0, 0], sizes = [8, 128], strides = [1, 1]} : vector<8x256xf32> to vector<8x128xf32>
    %14 = vector.extract_strided_slice %12 {offsets = [0, 128], sizes = [8, 128], strides = [1, 1]} : vector<8x256xf32> to vector<8x128xf32>
    %c0_10 = arith.constant 0 : index
    %c0_11 = arith.constant 0 : index
    %15 = vector.load %arg6[%c0_10, %c0_11] : memref<1x128xf32, #tpu.memory_space<vmem>>, vector<1x128xf32>
    %16 = vector.broadcast %15 : vector<1x128xf32> to vector<8x128xf32>
    %17 = arith.mulf %14, %16 : vector<8x128xf32>
    %cst_12 = arith.constant dense<0.000000e+00> : vector<8xf32>
    %18 = vector.multi_reduction <add>, %17, %cst_12 [1] : vector<8x128xf32> to vector<8xf32>
    %19 = vector.shape_cast %18 : vector<8xf32> to vector<8x1xf32>
    %c0_13 = arith.constant 0 : index
    %c0_14 = arith.constant 0 : index
    %20 = vector.load %arg7[%c0_13, %c0_14] : memref<1x1xf32, #tpu.memory_space<vmem>>, vector<1x1xf32>
    %21 = vector.broadcast %20 : vector<1x1xf32> to vector<8x1xf32>
    %22 = arith.addf %19, %21 : vector<8x1xf32>
    %23 = vector.shape_cast %22 : vector<8x1xf32> to vector<8x1xf32>
    %24 = vector.broadcast %23 : vector<8x1xf32> to vector<8x128xf32>
    %c0_15 = arith.constant 0 : index
    %c0_16 = arith.constant 0 : index
    %25 = vector.load %arg8[%c0_15, %c0_16] : memref<8x128xf32, #tpu.memory_space<vmem>>, vector<8x128xf32>
    tpu.vector_store %arg8[%c0_15, %c0_16], %24 {strides = array<i32>} : memref<8x128xf32, #tpu.memory_space<vmem>>, vector<8x128xf32>,
    %c0_17 = arith.constant 0 : index
    %c0_18 = arith.constant 0 : index
    %26 = vector.load %arg9[%c0_17, %c0_18] : memref<8x128xf32, #tpu.memory_space<vmem>>, vector<8x128xf32>
    tpu.vector_store %arg9[%c0_17, %c0_18], %13 {strides = array<i32>} : memref<8x128xf32, #tpu.memory_space<vmem>>, vector<8x128xf32>,
    return
  }
  func.func @transform_0(%arg0: i32) -> (i32, i32) {
    %c0_i32 = arith.constant 0 : i32
    %c0_i32_0 = arith.constant 0 : i32
    return %arg0, %c0_i32 : i32, i32
  }
  func.func @transform_1(%arg0: i32) -> (i32, i32) {
    %c0_i32 = arith.constant 0 : i32
    %c0_i32_0 = arith.constant 0 : i32
    %c0_i32_1 = arith.constant 0 : i32
    return %c0_i32, %c0_i32_0 : i32, i32
  }
  func.func @transform_2(%arg0: i32) -> (i32, i32) {
    %c0_i32 = arith.constant 0 : i32
    %c0_i32_0 = arith.constant 0 : i32
    %c0_i32_1 = arith.constant 0 : i32
    return %c0_i32, %c0_i32_0 : i32, i32
  }
  func.func @transform_3(%arg0: i32) -> (i32, i32) {
    %c0_i32 = arith.constant 0 : i32
    %c0_i32_0 = arith.constant 0 : i32
    %c0_i32_1 = arith.constant 0 : i32
    return %c0_i32, %c0_i32_0 : i32, i32
  }
  func.func @transform_4(%arg0: i32) -> (i32, i32) {
    %c0_i32 = arith.constant 0 : i32
    %c0_i32_0 = arith.constant 0 : i32
    %c0_i32_1 = arith.constant 0 : i32
    return %c0_i32, %c0_i32_0 : i32, i32
  }
  func.func @transform_5(%arg0: i32) -> (i32, i32) {
    %c0_i32 = arith.constant 0 : i32
    %c0_i32_0 = arith.constant 0 : i32
    %c0_i32_1 = arith.constant 0 : i32
    return %c0_i32, %c0_i32_0 : i32, i32
  }
  func.func @transform_6(%arg0: i32) -> (i32, i32) {
    %c0_i32 = arith.constant 0 : i32
    %c0_i32_0 = arith.constant 0 : i32
    %c0_i32_1 = arith.constant 0 : i32
    return %c0_i32, %c0_i32_0 : i32, i32
  }
  func.func @transform_7(%arg0: i32) -> (i32, i32) {
    %c0_i32 = arith.constant 0 : i32
    %c0_i32_0 = arith.constant 0 : i32
    return %arg0, %c0_i32 : i32, i32
  }
  func.func @transform_8(%arg0: i32) -> (i32, i32) {
    %c0_i32 = arith.constant 0 : i32
    %c0_i32_0 = arith.constant 0 : i32
    return %arg0, %c0_i32 : i32, i32
  }
}

</mosaic_0001>

<llo_original>
// kernel: tpu_custom_call.1
$region0: #{tpu_custom_call.1}
  #allocation0 [shape = 'u32[]', space=smem, size = 0x4, offset = 0x4, fixed_abs, tag = 'smem constant byte address 0x4 - core index']
  #allocation1 [shape = 'u32[144,128]{1,0:T(1,128)}', space=vmem, size = 0x12000, scoped, tag = 'internal scratch']
  #allocation2 [shape = 'f32[1,1]{1,0:T(1,128)S(1)}', space=vmem, size = 0x200, scoped, tag = 'scoped memory for tpu_custom_call.1']
  %s0 = inlined_call_operand.hbm [shape: f32[8,16], index: 0, kind: input, shape index: {}]
  %s1 = inlined_call_operand.hbm [shape: f32[16,256], index: 1, kind: input, shape index: {}]
  %s2 = inlined_call_operand.vmem [shape: f32[1,256], index: 2, kind: input, shape index: {}]
  %s3 = inlined_call_operand.hbm [shape: f32[256,256], index: 3, kind: input, shape index: {}]
  %s4 = inlined_call_operand.vmem [shape: f32[1,256], index: 4, kind: input, shape index: {}]
  %s5 = inlined_call_operand.vmem [shape: f32[1,128], index: 5, kind: input, shape index: {}]
  %s6 = inlined_call_operand.<no memory space> [shape: f32[1,1], index: 6, kind: input, shape index: {}]
  %s7 = inlined_call_operand.hbm [shape: f32[8,128], index: 7, kind: output, shape index: {0}]
  %s8 = inlined_call_operand.hbm [shape: f32[8,128], index: 8, kind: output, shape index: {1}]
  %9 = xla_tuple %s7, %s8
  %s10 = sld [smem:[#allocation0]]
  $region58: #{tpu_custom_call.1} parent=0
    _
  %s12 = ssub.s32 1, %s10
  %s13 = scalar_select 0, %s12, %s10
  %v14 = vstv %s6
  %15 = vst [vmem:[#allocation2] sm:$0x1] %v14
  $region1: #{tpu_custom_call.1} parent=0
    #allocation3 [shape = 'u8[4096]{0}', space=vmem, size = 0x1000, scoped, tag = 'input window, operand 0, single buffered']
    #allocation4 [shape = 's32[1]{0}', space=sflag, size = 0x4, scoped, tag = 'scoped memory for tpu_custom_call.1']
    #allocation5 [shape = 's32[1]{0}', space=sflag, size = 0x4, scoped, tag = 'scoped memory for tpu_custom_call.1']
    #allocation6 [shape = 'u8[16384]{0}', space=vmem, size = 0x4000, scoped, tag = 'input window, operand 1, single buffered']
    #allocation7 [shape = 's32[1]{0}', space=sflag, size = 0x4, scoped, tag = 'scoped memory for tpu_custom_call.1']
    #allocation8 [shape = 'u8[262144]{0}', space=vmem, size = 0x40000, scoped, tag = 'input window, operand 3, single buffered']
    #allocation9 [shape = 'u8[4096]{0}', space=vmem, size = 0x1000, scoped, tag = 'output window, operand 0, single buffered']
    #allocation10 [shape = 'u8[4096]{0}', space=vmem, size = 0x1000, scoped, tag = 'output window, operand 1, single buffered']
    #allocation11 [shape = 's32[1]{0}', space=sflag, size = 0x4, scoped, tag = 'scoped memory for tpu_custom_call.1']
    %16 = vsyncpa [#allocation4], 0
    %17 = vsyncpa [#allocation7], 0
    %18 = vsyncpa [#allocation5], 0
    %19 = vsyncpa [#allocation11], 0
    // Predicated region
    $region2: #{tpu_custom_call.1} parent=1 // pred_check
      _
    $region3: #{tpu_custom_call.1} parent=1 // pred_check_branch
      %21 = sbr.rel (0) target = $region5
    $region4: #{tpu_custom_call.1} parent=1 // pred_region
      %s23 = ssub.s32 128, 128
      %24 = vsyncadd [#allocation4], %s23
      %s26 = sshll.u32 [#allocation3], 4
      %s27 = int_to_ptr.vmem [resolvable:$true] %s26
      %29 = dma.hbm_to_vmem [thread:$0]  %s0, 128, %s27, [#allocation4]
    $region5: #{tpu_custom_call.1} parent=1 // pred_fallthru
      _
    // Predicated region
    $region6: #{tpu_custom_call.1} parent=1 // pred_check
      _
    $region7: #{tpu_custom_call.1} parent=1 // pred_check_branch
      %31 = sbr.rel (0) target = $region9
    $region8: #{tpu_custom_call.1} parent=1 // pred_region
      %s33 = ssub.s32 512, 512
      %34 = vsyncadd [#allocation7], %s33
      %s35 = sshll.u32 [#allocation6], 4
      %s36 = int_to_ptr.vmem [resolvable:$true] %s35
      %41 = dma.hbm_to_vmem [thread:$0]  %s1, 512, %s36, [#allocation7], 256, 256, 16
    $region9: #{tpu_custom_call.1} parent=1 // pred_fallthru
      _
    // Predicated region
    $region10: #{tpu_custom_call.1} parent=1 // pred_check
      _
    $region11: #{tpu_custom_call.1} parent=1 // pred_check_branch
      %43 = sbr.rel (0) target = $region13
    $region12: #{tpu_custom_call.1} parent=1 // pred_region
      _
    $region13: #{tpu_custom_call.1} parent=1 // pred_fallthru
      _
    // Predicated region
    $region14: #{tpu_custom_call.1} parent=1 // pred_check
      _
    $region15: #{tpu_custom_call.1} parent=1 // pred_check_branch
      %45 = sbr.rel (0) target = $region17
    $region16: #{tpu_custom_call.1} parent=1 // pred_region
      %s47 = ssub.s32 8192, 8192
      %48 = vsyncadd [#allocation7], %s47
      %s49 = sshll.u32 [#allocation8], 4
      %s50 = int_to_ptr.vmem [resolvable:$true] %s49
      %55 = dma.hbm_to_vmem [thread:$0]  %s3, 8192, %s50, [#allocation7], 256, 256, 16
    $region17: #{tpu_custom_call.1} parent=1 // pred_fallthru
      _
    // Predicated region
    $region18: #{tpu_custom_call.1} parent=1 // pred_check
      _
    $region19: #{tpu_custom_call.1} parent=1 // pred_check_branch
      %57 = sbr.rel (0) target = $region21
    $region20: #{tpu_custom_call.1} parent=1 // pred_region
      _
    $region21: #{tpu_custom_call.1} parent=1 // pred_fallthru
      _
    // Predicated region
    $region22: #{tpu_custom_call.1} parent=1 // pred_check
      _
    $region23: #{tpu_custom_call.1} parent=1 // pred_check_branch
      %59 = sbr.rel (0) target = $region25
    $region24: #{tpu_custom_call.1} parent=1 // pred_region
      _
    $region25: #{tpu_custom_call.1} parent=1 // pred_fallthru
      _
    // Predicated region
    $region26: #{tpu_custom_call.1} parent=1 // pred_check
      _
    $region27: #{tpu_custom_call.1} parent=1 // pred_check_branch
      %61 = sbr.rel (0) target = $region29
    $region28: #{tpu_custom_call.1} parent=1 // pred_region
      _
    $region29: #{tpu_custom_call.1} parent=1 // pred_fallthru
      _
    // Predicated region
    $region30: #{tpu_custom_call.1} parent=1 // pred_check
      _
    $region31: #{tpu_custom_call.1} parent=1 // pred_check_branch
      %63 = sbr.rel (0) target = $region33
    $region32: #{tpu_custom_call.1} parent=1 // pred_region
      %64 = dma.done [#allocation4], 128
    $region33: #{tpu_custom_call.1} parent=1 // pred_fallthru
      _
    // Predicated region
    $region34: #{tpu_custom_call.1} parent=1 // pred_check
      _
    $region35: #{tpu_custom_call.1} parent=1 // pred_check_branch
      %66 = sbr.rel (0) target = $region37
    $region36: #{tpu_custom_call.1} parent=1 // pred_region
      %67 = dma.done [#allocation7], 512
    $region37: #{tpu_custom_call.1} parent=1 // pred_fallthru
      _
    // Predicated region
    $region38: #{tpu_custom_call.1} parent=1 // pred_check
      _
    $region39: #{tpu_custom_call.1} parent=1 // pred_check_branch
      %69 = sbr.rel (0) target = $region41
    $region40: #{tpu_custom_call.1} parent=1 // pred_region
      %70 = dma.done [#allocation7], 8192
    $region41: #{tpu_custom_call.1} parent=1 // pred_fallthru
      _
    %v71 = vld [vmem:[#allocation3] sm:$0xff]
    %v72 = vld [vmem:[#allocation6] sm:$0xff]
    %v73 = vld [vmem:[#allocation6 + $0x8] sm:$0xff]
    %v74 = vld [vmem:[#allocation6 + $0x10] sm:$0xff]
    %v75 = vld [vmem:[#allocation6 + $0x18] sm:$0xff]
    %v76 = vld [vmem:[%s2] sm:$0x3]
    %v78 = vlaneseq
    %v79 = vshrl.u32 %v78, 7
    %v80 = vsub.s32 0, %v79
    %v81 = vrot.slane %v76, %v80
    %v82 = vlaneseq
    %v83 = vshrl.u32 %v82, 7
    %v84 = vsub.s32 1, %v83
    %v85 = vrot.slane %v76, %v84
    %vm88 = vcmask 130048
    %v90 = vsel %vm88, %v71, 0
    %92 = vmatprep.subr.mxu0 0.0
    %93 = vmatpush1.msra.mxu0 0.0
    %94 = vmatprep.subr.mxu0 0.0
    %95 = vmatpush1.msra.mxu0 0.0
    %96 = vmatprep.subr.mxu0 0.0
    %97 = vmatpush1.msra.mxu0 0.0
    %98 = vmatprep.subr.mxu0 0.0
    %99 = vmatpush1.msra.mxu0 0.0
    %100 = vmatprep.subr.mxu0 0.0
    %101 = vmatpush1.msra.mxu0 0.0
    %102 = vmatprep.subr.mxu0 0.0
    %103 = vmatpush1.msra.mxu0 0.0
    %104 = vmatprep.subr.mxu0 0.0
    %105 = vmatpush1.msra.mxu0 0.0
    %106 = vmatprep.subr.mxu0 0.0
    %107 = vmatpush1.msra.mxu0 0.0
    %108 = vmatprep.subr.mxu0 0.0
    %109 = vmatpush1.msra.mxu0 0.0
    %110 = vmatprep.subr.mxu0 0.0
    %111 = vmatpush1.msra.mxu0 0.0
    %112 = vmatprep.subr.mxu0 0.0
    %113 = vmatpush1.msra.mxu0 0.0
    %114 = vmatprep.subr.mxu0 0.0
    %115 = vmatpush1.msra.mxu0 0.0
    %116 = vmatprep.subr.mxu0 0.0
    %117 = vmatpush1.msra.mxu0 0.0
    %118 = vmatprep.subr.mxu0 0.0
    %119 = vmatpush1.msra.mxu0 0.0
    %120 = vmatprep.subr.mxu0 %v75
    %121 = vmatpush1.msra.mxu0 %v74
    %122 = vmatprep.subr.mxu0 %v73
    %123 = vmatpush1.msra.mxu0 %v72
    %124 = vmatprep.subr.mxu0 0.0
    %125 = vmatpush2.msra.mxu0 0.0
    %126 = vmatprep.subr.mxu0 0.0
    %127 = vmatpush2.msra.mxu0 0.0
    %128 = vmatprep.subr.mxu0 0.0
    %129 = vmatpush2.msra.mxu0 0.0
    %130 = vmatprep.subr.mxu0 0.0
    %131 = vmatpush2.msra.mxu0 0.0
    %132 = vmatprep.subr.mxu0 0.0
    %133 = vmatpush2.msra.mxu0 0.0
    %134 = vmatprep.subr.mxu0 0.0
    %135 = vmatpush2.msra.mxu0 0.0
    %136 = vmatprep.subr.mxu0 0.0
    %137 = vmatpush2.msra.mxu0 0.0
    %138 = vmatprep.subr.mxu0 0.0
    %139 = vmatpush2.msra.mxu0 0.0
    %140 = vmatprep.subr.mxu0 0.0
    %141 = vmatpush2.msra.mxu0 0.0
    %142 = vmatprep.subr.mxu0 0.0
    %143 = vmatpush2.msra.mxu0 0.0
    %144 = vmatprep.subr.mxu0 0.0
    %145 = vmatpush2.msra.mxu0 0.0
    %146 = vmatprep.subr.mxu0 0.0
    %147 = vmatpush2.msra.mxu0 0.0
    %148 = vmatprep.subr.mxu0 0.0
    %149 = vmatpush2.msra.mxu0 0.0
    %150 = vmatprep.subr.mxu0 0.0
    %151 = vmatpush2.msra.mxu0 0.0
    %152 = vmatprep.subr.mxu0 0.0
    %153 = vmatpush2.msra.mxu0 0.0
    %154 = vmatprep.subr.mxu0 0.0
    %155 = vmatpush2.msra.mxu0 0.0
    %156 = vmatprep.mubr.f32.mxu0 0.0
    %157 = vmatmul.mubr.f32.gmra.mxu0 %v90
    %v158 = vpop.f32.mrf.mxu0
    %v159 = vadd.f32 %v81, %v158
    %v160 = vpop.f32.mrf.mxu0
    %v161 = vadd.f32 %v85, %v160
    %162 = vdwg.mxu0
    %v163 = vtanh.pop %v159
    %v164 = vtanh.pop %v161
    %v165 = vld [vmem:[#allocation8] sm:$0xff]
    %v166 = vld [vmem:[#allocation8 + $0x8] sm:$0xff]
    %v167 = vld [vmem:[#allocation8 + $0x10] sm:$0xff]
    %v168 = vld [vmem:[#allocation8 + $0x18] sm:$0xff]
    %v169 = vld [vmem:[#allocation8 + $0x20] sm:$0xff]
    %v170 = vld [vmem:[#allocation8 + $0x28] sm:$0xff]
    %v171 = vld [vmem:[#allocation8 + $0x30] sm:$0xff]
    %v172 = vld [vmem:[#allocation8 + $0x38] sm:$0xff]
    %v173 = vld [vmem:[#allocation8 + $0x40] sm:$0xff]
    %v174 = vld [vmem:[#allocation8 + $0x48] sm:$0xff]
    %v175 = vld [vmem:[#allocation8 + $0x50] sm:$0xff]
    %v176 = vld [vmem:[#allocation8 + $0x58] sm:$0xff]
    %v177 = vld [vmem:[#allocation8 + $0x60] sm:$0xff]
    %v178 = vld [vmem:[#allocation8 + $0x68] sm:$0xff]
    %v179 = vld [vmem:[#allocation8 + $0x70] sm:$0xff]
    %v180 = vld [vmem:[#allocation8 + $0x78] sm:$0xff]
    %v181 = vld [vmem:[#allocation8 + $0x80] sm:$0xff]
    %v182 = vld [vmem:[#allocation8 + $0x88] sm:$0xff]
    %v183 = vld [vmem:[#allocation8 + $0x90] sm:$0xff]
    %v184 = vld [vmem:[#allocation8 + $0x98] sm:$0xff]
    %v185 = vld [vmem:[#allocation8 + $0xa0] sm:$0xff]
    %v186 = vld [vmem:[#allocation8 + $0xa8] sm:$0xff]
    %v187 = vld [vmem:[#allocation8 + $0xb0] sm:$0xff]
    %v188 = vld [vmem:[#allocation8 + $0xb8] sm:$0xff]
    %v189 = vld [vmem:[#allocation8 + $0xc0] sm:$0xff]
    %v190 = vld [vmem:[#allocation8 + $0xc8] sm:$0xff]
    %v191 = vld [vmem:[#allocation8 + $0xd0] sm:$0xff]
    %v192 = vld [vmem:[#allocation8 + $0xd8] sm:$0xff]
    %v193 = vld [vmem:[#allocation8 + $0xe0] sm:$0xff]
    %v194 = vld [vmem:[#allocation8 + $0xe8] sm:$0xff]
    %v195 = vld [vmem:[#allocation8 + $0xf0] sm:$0xff]
    %v196 = vld [vmem:[#allocation8 + $0xf8] sm:$0xff]
    %v197 = vld [vmem:[#allocation8 + $0x100] sm:$0xff]
    %v198 = vld [vmem:[#allocation8 + $0x108] sm:$0xff]
    %v199 = vld [vmem:[#allocation8 + $0x110] sm:$0xff]
    %v200 = vld [vmem:[#allocation8 + $0x118] sm:$0xff]
    %v201 = vld [vmem:[#allocation8 + $0x120] sm:$0xff]
    %v202 = vld [vmem:[#allocation8 + $0x128] sm:$0xff]
    %v203 = vld [vmem:[#allocation8 + $0x130] sm:$0xff]
    %v204 = vld [vmem:[#allocation8 + $0x138] sm:$0xff]
    %v205 = vld [vmem:[#allocation8 + $0x140] sm:$0xff]
    %v206 = vld [vmem:[#allocation8 + $0x148] sm:$0xff]
    %v207 = vld [vmem:[#allocation8 + $0x150] sm:$0xff]
    %v208 = vld [vmem:[#allocation8 + $0x158] sm:$0xff]
    %v209 = vld [vmem:[#allocation8 + $0x160] sm:$0xff]
    %v210 = vld [vmem:[#allocation8 + $0x168] sm:$0xff]
    %v211 = vld [vmem:[#allocation8 + $0x170] sm:$0xff]
    %v212 = vld [vmem:[#allocation8 + $0x178] sm:$0xff]
    %v213 = vld [vmem:[#allocation8 + $0x180] sm:$0xff]
    %v214 = vld [vmem:[#allocation8 + $0x188] sm:$0xff]
    %v215 = vld [vmem:[#allocation8 + $0x190] sm:$0xff]
    %v216 = vld [vmem:[#allocation8 + $0x198] sm:$0xff]
    %v217 = vld [vmem:[#allocation8 + $0x1a0] sm:$0xff]
    %v218 = vld [vmem:[#allocation8 + $0x1a8] sm:$0xff]
    %v219 = vld [vmem:[#allocation8 + $0x1b0] sm:$0xff]
    %v220 = vld [vmem:[#allocation8 + $0x1b8] sm:$0xff]
    %v221 = vld [vmem:[#allocation8 + $0x1c0] sm:$0xff]
    %v222 = vld [vmem:[#allocation8 + $0x1c8] sm:$0xff]
    %v223 = vld [vmem:[#allocation8 + $0x1d0] sm:$0xff]
    %v224 = vld [vmem:[#allocation8 + $0x1d8] sm:$0xff]
    %v225 = vld [vmem:[#allocation8 + $0x1e0] sm:$0xff]
    %v226 = vld [vmem:[#allocation8 + $0x1e8] sm:$0xff]
    %v227 = vld [vmem:[#allocation8 + $0x1f0] sm:$0xff]
    %v228 = vld [vmem:[#allocation8 + $0x1f8] sm:$0xff]
    %v229 = vld [vmem:[%s4] sm:$0x3]
    %v231 = vlaneseq
    %v232 = vshrl.u32 %v231, 7
    %v233 = vsub.s32 0, %v232
    %v234 = vrot.slane %v229, %v233
    %v235 = vlaneseq
    %v236 = vshrl.u32 %v235, 7
    %v237 = vsub.s32 1, %v236
    %v238 = vrot.slane %v229, %v237
    %241 = vmatprep.subr.mxu0 %v196
    %242 = vmatpush1.msra.mxu0 %v195
    %243 = vmatprep.subr.mxu0 %v194
    %244 = vmatpush1.msra.mxu0 %v193
    %245 = vmatprep.subr.mxu0 %v192
    %246 = vmatpush1.msra.mxu0 %v191
    %247 = vmatprep.subr.mxu0 %v190
    %248 = vmatpush1.msra.mxu0 %v189
    %249 = vmatprep.subr.mxu0 %v188
    %250 = vmatpush1.msra.mxu0 %v187
    %251 = vmatprep.subr.mxu0 %v186
    %252 = vmatpush1.msra.mxu0 %v185
    %253 = vmatprep.subr.mxu0 %v184
    %254 = vmatpush1.msra.mxu0 %v183
    %255 = vmatprep.subr.mxu0 %v182
    %256 = vmatpush1.msra.mxu0 %v181
    %257 = vmatprep.subr.mxu0 %v180
    %258 = vmatpush1.msra.mxu0 %v179
    %259 = vmatprep.subr.mxu0 %v178
    %260 = vmatpush1.msra.mxu0 %v177
    %261 = vmatprep.subr.mxu0 %v176
    %262 = vmatpush1.msra.mxu0 %v175
    %263 = vmatprep.subr.mxu0 %v174
    %264 = vmatpush1.msra.mxu0 %v173
    %265 = vmatprep.subr.mxu0 %v172
    %266 = vmatpush1.msra.mxu0 %v171
    %267 = vmatprep.subr.mxu0 %v170
    %268 = vmatpush1.msra.mxu0 %v169
    %269 = vmatprep.subr.mxu0 %v168
    %270 = vmatpush1.msra.mxu0 %v167
    %271 = vmatprep.subr.mxu0 %v166
    %272 = vmatpush1.msra.mxu0 %v165
    %273 = vmatprep.subr.mxu0 %v228
    %274 = vmatpush2.msra.mxu0 %v227
    %275 = vmatprep.subr.mxu0 %v226
    %276 = vmatpush2.msra.mxu0 %v225
    %277 = vmatprep.subr.mxu0 %v224
    %278 = vmatpush2.msra.mxu0 %v223
    %279 = vmatprep.subr.mxu0 %v222
    %280 = vmatpush2.msra.mxu0 %v221
    %281 = vmatprep.subr.mxu0 %v220
    %282 = vmatpush2.msra.mxu0 %v219
    %283 = vmatprep.subr.mxu0 %v218
    %284 = vmatpush2.msra.mxu0 %v217
    %285 = vmatprep.subr.mxu0 %v216
    %286 = vmatpush2.msra.mxu0 %v215
    %287 = vmatprep.subr.mxu0 %v214
    %288 = vmatpush2.msra.mxu0 %v213
    %289 = vmatprep.subr.mxu0 %v212
    %290 = vmatpush2.msra.mxu0 %v211
    %291 = vmatprep.subr.mxu0 %v210
    %292 = vmatpush2.msra.mxu0 %v209
    %293 = vmatprep.subr.mxu0 %v208
    %294 = vmatpush2.msra.mxu0 %v207
    %295 = vmatprep.subr.mxu0 %v206
    %296 = vmatpush2.msra.mxu0 %v205
    %297 = vmatprep.subr.mxu0 %v204
    %298 = vmatpush2.msra.mxu0 %v203
    %299 = vmatprep.subr.mxu0 %v202
    %300 = vmatpush2.msra.mxu0 %v201
    %301 = vmatprep.subr.mxu0 %v200
    %302 = vmatpush2.msra.mxu0 %v199
    %303 = vmatprep.subr.mxu0 %v198
    %304 = vmatpush2.msra.mxu0 %v197
    %305 = vmatprep.mubr.f32.mxu0 %v164
    %306 = vmatmul.mubr.f32.gmra.mxu0 %v163
    %v307 = vpop.f32.mrf.mxu0
    %v308 = vadd.f32 %v234, %v307
    %v309 = vpop.f32.mrf.mxu0
    %v310 = vadd.f32 %v238, %v309
    %311 = vdwg.mxu0
    %v312 = vtanh.pop %v308
    %v313 = vtanh.pop %v310
    %v314 = vld [vmem:[%s5] sm:$0x1]
    %v316 = vlaneseq
    %v317 = vshrl.u32 %v316, 7
    %v318 = vsub.s32 0, %v317
    %v319 = vrot.slane %v314, %v318
    %v321 = vmul.f32 %v313, %v319
    %322 = vadd.xlane.f32.xlu0 %v321
    %v323 = vpop.xlane.xlu0 %322
    %v324 = vld [vmem:[#allocation2] sm:$0x1]
    %v326 = vlaneseq
    %v327 = vshrl.u32 %v326, 7
    %v328 = vsub.s32 0, %v327
    %v329 = vrot.slane %v324, %v328
    %v331 = vadd.f32 %v323, %v329
    %333 = vset.pattern.permute.xlu0 0
    %334 = vperm.xlu0 %333, %v331
    %v335 = vpop.permute.xlu0 %334
    %337 = vst [vmem:[#allocation9] sm:$0xff] %v335
    %338 = vst [vmem:[#allocation10] sm:$0xff] %v312
    // Predicated region
    $region42: #{tpu_custom_call.1} parent=1 // pred_check
      _
    $region43: #{tpu_custom_call.1} parent=1 // pred_check_branch
      %340 = sbr.rel (0) target = $region45
    $region44: #{tpu_custom_call.1} parent=1 // pred_region
      %s342 = ssub.s32 128, 128
      %343 = vsyncadd [#allocation5], %s342
      %s345 = sshll.u32 [#allocation9], 4
      %s346 = int_to_ptr.vmem [resolvable:$true] %s345
      %348 = dma.vmem_to_hbm [thread:$0]  %s346, 128, %s7, [#allocation5]
    $region45: #{tpu_custom_call.1} parent=1 // pred_fallthru
      _
    // Predicated region
    $region46: #{tpu_custom_call.1} parent=1 // pred_check
      _
    $region47: #{tpu_custom_call.1} parent=1 // pred_check_branch
      %350 = sbr.rel (0) target = $region49
    $region48: #{tpu_custom_call.1} parent=1 // pred_region
      %s352 = ssub.s32 128, 128
      %353 = vsyncadd [#allocation11], %s352
      %s355 = sshll.u32 [#allocation10], 4
      %s356 = int_to_ptr.vmem [resolvable:$true] %s355
      %358 = dma.vmem_to_hbm [thread:$0]  %s356, 128, %s8, [#allocation11]
    $region49: #{tpu_custom_call.1} parent=1 // pred_fallthru
      _
    // Predicated region
    $region50: #{tpu_custom_call.1} parent=1 // pred_check
      _
    $region51: #{tpu_custom_call.1} parent=1 // pred_check_branch
      %360 = sbr.rel (0) target = $region53
    $region52: #{tpu_custom_call.1} parent=1 // pred_region
      %361 = dma.done [#allocation5], 128
    $region53: #{tpu_custom_call.1} parent=1 // pred_fallthru
      _
    // Predicated region
    $region54: #{tpu_custom_call.1} parent=1 // pred_check
      _
    $region55: #{tpu_custom_call.1} parent=1 // pred_check_branch
      %363 = sbr.rel (0) target = $region57
    $region56: #{tpu_custom_call.1} parent=1 // pred_region
      %364 = dma.done [#allocation11], 128
    $region57: #{tpu_custom_call.1} parent=1 // pred_fallthru
      _
    %365 = vsyncpa [#allocation4], 1
    %366 = vsyncpa [#allocation7], 1
    %367 = vsyncpa [#allocation5], 1
    %368 = vsyncpa [#allocation11], 1

</llo_original>
